<compile_context>
chip_gen: v7x
topology: tpu7x:2x2x1
jax: 0.10.0
libtpu: 0.0.40
codegen_flags: <defaults>
</compile_context>

<pallas_src>
import functools

import jax
import jax.numpy as jnp
from jax.experimental import pallas as pl
from jax.experimental.pallas import tpu as pltpu

EPS = 1e-5
LANE = 128

# f32 vector slab rows (one (8,128) tile).
_ROW_BW0 = 0     # bn0_beta @ W0  (pre-aggregation bias term of conv0)
_ROW_B0 = 1      # conv0 bias
_ROW_B1 = 2      # conv1 bias
_ROW_BN1G = 3    # BatchNorm(H) gamma
_ROW_BN1B = 4    # BatchNorm(H) beta
_ROW_LB0 = 5     # linear0 bias
_ROW_LB1 = 6     # linear1 bias
_ROW_OB = 7      # output bias (lane 0)
_VEC_ROWS = 8

# bf16 weight slab: 5 stacked [128,128] blocks.
_N_WBLOCKS = 5   # w0 (BN0-folded), w1, lw0, lw1, ow


def gcn_forward_kernel(x_ref, a_ref, pool_ref, w_ref, v_ref, out_ref, *, num_graphs):
    """x_ref   : [N, 128]   f32  node features (cols 0..3 real, rest zero)
       a_ref   : [N, N]     bf16 normalized adjacency with self-loops
       pool_ref: [GP, N]    bf16 one-hot graph-assignment (rows >= num_graphs zero)
       w_ref   : [640, 128] bf16 packed weight blocks
       v_ref   : [8, 128]   f32  packed bias / BN vectors
       out_ref : [GP, 128]  f32  column 0 = model output
    """
    f32 = jnp.float32
    bf16 = jnp.bfloat16

    # ---- unpack parameters (static slices) ----
    vec = v_ref[...]
    bw0 = vec[_ROW_BW0:_ROW_BW0 + 1, :]
    b0 = vec[_ROW_B0:_ROW_B0 + 1, :]
    b1 = vec[_ROW_B1:_ROW_B1 + 1, :]
    bn1_g = vec[_ROW_BN1G:_ROW_BN1G + 1, :]
    bn1_b = vec[_ROW_BN1B:_ROW_BN1B + 1, :]
    lb0 = vec[_ROW_LB0:_ROW_LB0 + 1, :]
    lb1 = vec[_ROW_LB1:_ROW_LB1 + 1, :]
    ob = vec[_ROW_OB:_ROW_OB + 1, :]

    w0 = w_ref[0 * LANE:1 * LANE, :]     # BN0 affine already folded in
    w1 = w_ref[1 * LANE:2 * LANE, :]
    lw0 = w_ref[2 * LANE:3 * LANE, :]
    lw1 = w_ref[3 * LANE:4 * LANE, :]
    ow = w_ref[4 * LANE:5 * LANE, :]

    # ---- BatchNorm(4) over the node dimension (training-mode batch stats).
    # Affine part is folded into w0 / bw0; padded zero columns stay zero. ----
    x = x_ref[...]
    mu0 = jnp.mean(x, axis=0, keepdims=True)
    var0 = jnp.mean((x - mu0) * (x - mu0), axis=0, keepdims=True)
    z = (x - mu0) * jax.lax.rsqrt(var0 + EPS)

    a = a_ref[...]                                                 # bf16 [N, N]

    # ---- GCNConv 0: A_norm @ (z W0' + beta W0) + b0  (all dots bf16 on MXU) ----
    h = jnp.dot(z.astype(bf16), w0, preferred_element_type=f32) + bw0
    h = jnp.dot(a, h.astype(bf16), preferred_element_type=f32) + b0

    # ---- GCNConv 1: A_norm @ (h W1) + b1 ----
    h = jnp.dot(h.astype(bf16), w1, preferred_element_type=f32)
    h = jnp.dot(a, h.astype(bf16), preferred_element_type=f32) + b1

    # ---- global_add_pool via one-hot assignment matmul -> [GP, 128] ----
    g = jnp.dot(pool_ref[...], h.astype(bf16), preferred_element_type=f32)

    # ---- BatchNorm(H) over the (real) graph rows; padded rows are masked
    # out of the statistics (they are exactly zero, so the mean only needs
    # the 1/num_graphs scale; the variance uses an explicit row mask). ----
    inv_g = f32(1.0 / num_graphs)
    mu1 = jnp.sum(g, axis=0, keepdims=True) * inv_g
    row_ids = jax.lax.broadcasted_iota(jnp.int32, g.shape, 0)
    row_mask = (row_ids < num_graphs).astype(f32)
    diff = (g - mu1) * row_mask
    var1 = jnp.sum(diff * diff, axis=0, keepdims=True) * inv_g
    gn = (g - mu1) * jax.lax.rsqrt(var1 + EPS)
    gn = gn * bn1_g + bn1_b

    # ---- hidden Linear layers (no activation in the reference forward) ----
    gn = jnp.dot(gn.astype(bf16), lw0, preferred_element_type=f32) + lb0
    gn = jnp.dot(gn.astype(bf16), lw1, preferred_element_type=f32) + lb1

    # ---- output Linear; lane-dense unmasked store (col 0 is the scalar) ----
    out_ref[...] = jnp.dot(gn.astype(bf16), ow, preferred_element_type=f32) + ob


def build_param_slabs(params):
    """Pack parameters into one bf16 weight slab [640,128] + one f32 vec tile [8,128]."""
    f32 = jnp.float32
    bf16 = jnp.bfloat16
    H = params["w0"].shape[1]
    assert 1 <= H <= LANE

    # Fold BatchNorm(4) affine into conv0's weight / pre-aggregation bias.
    gamma0 = params["bn0_g"].reshape(4, 1).astype(f32)        # (4,1)
    beta0 = params["bn0_b"].reshape(1, 4).astype(f32)         # (1,4)
    w0_f = gamma0 * params["w0"].astype(f32)                  # diag(gamma) @ W0
    bw0 = beta0 @ params["w0"].astype(f32)                    # (1,H)

    vec = jnp.zeros((_VEC_ROWS, LANE), f32)
    vec = vec.at[_ROW_BW0, :H].set(bw0.reshape(-1))
    vec = vec.at[_ROW_B0, :H].set(params["b0"].reshape(-1))
    vec = vec.at[_ROW_B1, :H].set(params["b1"].reshape(-1))
    vec = vec.at[_ROW_BN1G, :H].set(params["bn1_g"].reshape(-1))
    vec = vec.at[_ROW_BN1B, :H].set(params["bn1_b"].reshape(-1))
    vec = vec.at[_ROW_LB0, :H].set(params["lb0"].reshape(-1))
    vec = vec.at[_ROW_LB1, :H].set(params["lb1"].reshape(-1))
    vec = vec.at[_ROW_OB, 0].set(params["ob"].reshape(()))

    def pad_sq(m):
        out = jnp.zeros((LANE, LANE), f32)
        return out.at[: m.shape[0], : m.shape[1]].set(m.astype(f32))

    wslab = jnp.concatenate(
        [pad_sq(w0_f), pad_sq(params["w1"]), pad_sq(params["lw0"]),
         pad_sq(params["lw1"]), pad_sq(params["ow"])],
        axis=0,
    ).astype(bf16)
    assert wslab.shape == (_N_WBLOCKS * LANE, LANE)
    return wslab, vec


@functools.partial(jax.jit, static_argnames=("num_graphs",))
def gcn_forward(x, edge_index, batch, params, num_graphs):
    """Plain-JAX glue (densify graph structure) + one fused Pallas kernel."""
    N = x.shape[0]
    G = num_graphs
    GP = max(8, ((G + 7) // 8) * 8)            # pad graph dim to sublane granule
    f32 = jnp.float32
    bf16 = jnp.bfloat16

    # ---- normalized adjacency A_norm = D^-1/2 (A + I) D^-1/2 built with one
    # scatter (edge weights + self-loop weights together) and one bf16 cast.
    # Messages flow src=edge_index[0] -> dst=edge_index[1]. ----
    src, dst = edge_index[0], edge_index[1]
    deg = jnp.zeros((N,), f32).at[dst].add(1.0) + 1.0          # in-degree + self-loop
    d_inv_sqrt = jax.lax.rsqrt(deg)                            # deg >= 1 always
    node_ids = jnp.arange(N)
    rows = jnp.concatenate([dst, node_ids])
    cols = jnp.concatenate([src, node_ids])
    vals = jnp.concatenate([d_inv_sqrt[dst] * d_inv_sqrt[src],
                            d_inv_sqrt * d_inv_sqrt])
    a_norm = jnp.zeros((N, N), f32).at[rows, cols].add(vals).astype(bf16)

    # One-hot pooling matrix [GP, N]; rows >= G are all-zero (exact in bf16).
    pool = (jnp.arange(GP)[:, None] == batch[None, :]).astype(bf16)

    # Pad node features to the 128-lane width.
    x_pad = jnp.zeros((N, LANE), f32).at[:, : x.shape[1]].set(x.astype(f32))

    wslab, vslab = build_param_slabs(params)

    flops = 2 * (2 * N * LANE * LANE          # feature transforms
                 + 2 * N * N * LANE           # two aggregations
                 + GP * N * LANE              # pooling
                 + 3 * GP * LANE * LANE)      # MLP head
    bytes_accessed = (x_pad.size * 4 + a_norm.size * 2 + pool.size * 2
                      + wslab.size * 2 + vslab.size * 4 + GP * LANE * 4)

    vmem = pltpu.MemorySpace.VMEM
    out = pl.pallas_call(
        functools.partial(gcn_forward_kernel, num_graphs=G),
        out_shape=jax.ShapeDtypeStruct((GP, LANE), f32),
        in_specs=[pl.BlockSpec(memory_space=vmem) for _ in range(5)],
        out_specs=pl.BlockSpec(memory_space=vmem),
        compiler_params=pltpu.CompilerParams(vmem_limit_bytes=32 * 1024 * 1024),
        cost_estimate=pl.CostEstimate(flops=flops,
                                      transcendentals=2 * LANE,
                                      bytes_accessed=bytes_accessed),
    )(x_pad, a_norm, pool, wslab, vslab)

    return out[:G, :1]   # real result lives in lane 0 of the first G rows


def make_params(key, hidden):
    """Deterministic synthetic parameters with the shapes GCN.__init__ implies."""
    ks = jax.random.split(key, 12)
    f32 = jnp.float32
    H = hidden

    def unif(k, shape, scale):
        return jax.random.uniform(k, shape, f32, -scale, scale)

    return {
        # BatchNorm(4)
        "bn0_g": jnp.ones((1, 4), f32),
        "bn0_b": jnp.zeros((1, 4), f32),
        # GCNConv(4, H): weight [in, out], bias [out]
        "w0": unif(ks[0], (4, H), 0.5),
        "b0": unif(ks[1], (1, H), 0.1),
        # GCNConv(H, H)
        "w1": unif(ks[2], (H, H), 0.2),
        "b1": unif(ks[3], (1, H), 0.1),
        # BatchNorm(H)
        "bn1_g": jnp.ones((1, H), f32),
        "bn1_b": jnp.zeros((1, H), f32),
        # Linear(H, H) x2 (stored in x out so kernel does g @ W)
        "lw0": unif(ks[4], (H, H), 0.2),
        "lb0": unif(ks[5], (1, H), 0.1),
        "lw1": unif(ks[6], (H, H), 0.2),
        "lb1": unif(ks[7], (1, H), 0.1),
        # Linear(H, 1)
        "ow": unif(ks[8], (H, 1), 0.2),
        "ob": unif(ks[9], (1, 1), 0.1),
    }


if __name__ == "__main__":
    key = jax.random.PRNGKey(0)
    k_x, k_e, k_p = jax.random.split(key, 3)

    N = 32          # total nodes across the batch of graphs
    G = 4           # number of graphs
    E = 64          # number of directed edges
    HIDDEN = 32     # hidden_channels

    # Node features [N, 4]
    x = jax.random.normal(k_x, (N, 4), jnp.float32)

    # Random edge_index [2, E] restricted so edges stay within a graph's
    # contiguous 8-node range.
    nodes_per_graph = N // G
    graph_of_edge = jax.random.randint(k_e, (E,), 0, G)
    k_s, k_d = jax.random.split(k_e)
    src = graph_of_edge * nodes_per_graph + jax.random.randint(k_s, (E,), 0, nodes_per_graph)
    dst = graph_of_edge * nodes_per_graph + jax.random.randint(k_d, (E,), 0, nodes_per_graph)
    edge_index = jnp.stack([src, dst], axis=0)

    # batch vector: node i belongs to graph i // nodes_per_graph
    batch = jnp.arange(N) // nodes_per_graph

    params = make_params(k_p, HIDDEN)

    out = gcn_forward(x, edge_index, batch, params, num_graphs=G)
    jax.block_until_ready(out)
    assert out.shape == (G, 1)
    print("KERNEL_OK")
</pallas_src>

<mosaic_0001>
module attributes {stable_mosaic.version = 11 : i64} {
  func.func private @main(%arg0: i32) attributes {dimension_semantics = [#tpu.dimension_semantics<core_parallel>], iteration_bounds = array<i64: 2>, tpu.core_type = #tpu.core_type<sc_scalar_subcore>, window_params = []} {
    return
  }
}

module attributes {stable_mosaic.version = 11 : i64} {
  func.func private @main(%arg0: i32) attributes {dimension_semantics = [#tpu.dimension_semantics<core_parallel>], iteration_bounds = array<i64: 2>, tpu.core_type = #tpu.core_type<sc_scalar_subcore>, window_params = []} {
    return
  }
}

module attributes {stable_mosaic.version = 11 : i64} {
  func.func @gcn_forward_kernel(%arg0: memref<32x128xf32, #tpu.memory_space<vmem>>, %arg1: memref<32x32xbf16, #tpu.memory_space<vmem>>, %arg2: memref<8x32xbf16, #tpu.memory_space<vmem>>, %arg3: memref<640x128xbf16, #tpu.memory_space<vmem>>, %arg4: memref<8x128xf32, #tpu.memory_space<vmem>>, %arg5: memref<8x128xf32, #tpu.memory_space<vmem>>) attributes {dimension_semantics = [], scalar_prefetch = 0 : i64, scratch_operands = 0 : i64, tpu.core_type = #tpu.core_type<tc>} {
    %c0 = arith.constant 0 : index
    %c0_0 = arith.constant 0 : index
    %0 = vector.load %arg4[%c0, %c0_0] : memref<8x128xf32, #tpu.memory_space<vmem>>, vector<8x128xf32>
    %1 = vector.extract_strided_slice %0 {offsets = [0, 0], sizes = [1, 128], strides = [1, 1]} : vector<8x128xf32> to vector<1x128xf32>
    %2 = vector.extract_strided_slice %0 {offsets = [1, 0], sizes = [1, 128], strides = [1, 1]} : vector<8x128xf32> to vector<1x128xf32>
    %3 = vector.extract_strided_slice %0 {offsets = [2, 0], sizes = [1, 128], strides = [1, 1]} : vector<8x128xf32> to vector<1x128xf32>
    %4 = vector.extract_strided_slice %0 {offsets = [3, 0], sizes = [1, 128], strides = [1, 1]} : vector<8x128xf32> to vector<1x128xf32>
    %5 = vector.extract_strided_slice %0 {offsets = [4, 0], sizes = [1, 128], strides = [1, 1]} : vector<8x128xf32> to vector<1x128xf32>
    %6 = vector.extract_strided_slice %0 {offsets = [5, 0], sizes = [1, 128], strides = [1, 1]} : vector<8x128xf32> to vector<1x128xf32>
    %7 = vector.extract_strided_slice %0 {offsets = [6, 0], sizes = [1, 128], strides = [1, 1]} : vector<8x128xf32> to vector<1x128xf32>
    %8 = vector.extract_strided_slice %0 {offsets = [7, 0], sizes = [1, 128], strides = [1, 1]} : vector<8x128xf32> to vector<1x128xf32>
    %c0_1 = arith.constant 0 : index
    %c0_2 = arith.constant 0 : index
    %9 = vector.load %arg3[%c0_1, %c0_2] : memref<640x128xbf16, #tpu.memory_space<vmem>>, vector<128x128xbf16>
    %c128 = arith.constant 128 : index
    %c0_3 = arith.constant 0 : index
    %10 = vector.load %arg3[%c128, %c0_3] : memref<640x128xbf16, #tpu.memory_space<vmem>>, vector<128x128xbf16>
    %c256 = arith.constant 256 : index
    %c0_4 = arith.constant 0 : index
    %11 = vector.load %arg3[%c256, %c0_4] : memref<640x128xbf16, #tpu.memory_space<vmem>>, vector<128x128xbf16>
    %c384 = arith.constant 384 : index
    %c0_5 = arith.constant 0 : index
    %12 = vector.load %arg3[%c384, %c0_5] : memref<640x128xbf16, #tpu.memory_space<vmem>>, vector<128x128xbf16>
    %c512 = arith.constant 512 : index
    %c0_6 = arith.constant 0 : index
    %13 = vector.load %arg3[%c512, %c0_6] : memref<640x128xbf16, #tpu.memory_space<vmem>>, vector<128x128xbf16>
    %c0_7 = arith.constant 0 : index
    %c0_8 = arith.constant 0 : index
    %14 = vector.load %arg0[%c0_7, %c0_8] : memref<32x128xf32, #tpu.memory_space<vmem>>, vector<32x128xf32>
    %cst = arith.constant dense<0.000000e+00> : vector<128xf32>
    %15 = vector.multi_reduction <add>, %14, %cst [0] : vector<32x128xf32> to vector<128xf32>
    %16 = vector.shape_cast %15 : vector<128xf32> to vector<1x128xf32>
    %cst_9 = arith.constant 3.200000e+01 : f32
    %17 = vector.broadcast %cst_9 : f32 to vector<1x128xf32>
    %18 = arith.divf %16, %17 : vector<1x128xf32>
    %19 = vector.broadcast %18 : vector<1x128xf32> to vector<32x128xf32>
    %20 = arith.subf %14, %19 : vector<32x128xf32>
    %21 = vector.broadcast %18 : vector<1x128xf32> to vector<32x128xf32>
    %22 = arith.subf %14, %21 : vector<32x128xf32>
    %23 = arith.mulf %20, %22 : vector<32x128xf32>
    %cst_10 = arith.constant dense<0.000000e+00> : vector<128xf32>
    %24 = vector.multi_reduction <add>, %23, %cst_10 [0] : vector<32x128xf32> to vector<128xf32>
    %25 = vector.shape_cast %24 : vector<128xf32> to vector<1x128xf32>
    %cst_11 = arith.constant 3.200000e+01 : f32
    %26 = vector.broadcast %cst_11 : f32 to vector<1x128xf32>
    %27 = arith.divf %25, %26 : vector<1x128xf32>
    %28 = vector.broadcast %18 : vector<1x128xf32> to vector<32x128xf32>
    %29 = arith.subf %14, %28 : vector<32x128xf32>
    %cst_12 = arith.constant 9.99999974E-6 : f32
    %30 = vector.broadcast %cst_12 : f32 to vector<1x128xf32>
    %31 = arith.addf %27, %30 : vector<1x128xf32>
    %32 = math.rsqrt %31 : vector<1x128xf32>
    %33 = vector.broadcast %32 : vector<1x128xf32> to vector<32x128xf32>
    %34 = arith.mulf %29, %33 : vector<32x128xf32>
    %c0_13 = arith.constant 0 : index
    %c0_14 = arith.constant 0 : index
    %35 = vector.load %arg1[%c0_13, %c0_14] : memref<32x32xbf16, #tpu.memory_space<vmem>>, vector<32x32xbf16>
    %36 = arith.truncf %34 : vector<32x128xf32> to vector<32x128xbf16>
    %cst_15 = arith.constant dense<0.000000e+00> : vector<32x128xf32>
    %37 = tpu.matmul %36, %9, %cst_15 {dimension_numbers = #tpu.dot_dimension_numbers<[1], [0], [0], [1], [0, 0, 1, 1], [], []>} : vector<32x128xbf16>, vector<128x128xbf16>, vector<32x128xf32> -> vector<32x128xf32>
    %38 = vector.broadcast %1 : vector<1x128xf32> to vector<32x128xf32>
    %39 = arith.addf %37, %38 : vector<32x128xf32>
    %40 = arith.truncf %39 : vector<32x128xf32> to vector<32x128xbf16>
    %cst_16 = arith.constant dense<0.000000e+00> : vector<32x128xf32>
    %41 = tpu.matmul %35, %40, %cst_16 {dimension_numbers = #tpu.dot_dimension_numbers<[1], [0], [0], [1], [0, 0, 1, 1], [], []>} : vector<32x32xbf16>, vector<32x128xbf16>, vector<32x128xf32> -> vector<32x128xf32>
    %42 = vector.broadcast %2 : vector<1x128xf32> to vector<32x128xf32>
    %43 = arith.addf %41, %42 : vector<32x128xf32>
    %44 = arith.truncf %43 : vector<32x128xf32> to vector<32x128xbf16>
    %cst_17 = arith.constant dense<0.000000e+00> : vector<32x128xf32>
    %45 = tpu.matmul %44, %10, %cst_17 {dimension_numbers = #tpu.dot_dimension_numbers<[1], [0], [0], [1], [0, 0, 1, 1], [], []>} : vector<32x128xbf16>, vector<128x128xbf16>, vector<32x128xf32> -> vector<32x128xf32>
    %46 = arith.truncf %45 : vector<32x128xf32> to vector<32x128xbf16>
    %cst_18 = arith.constant dense<0.000000e+00> : vector<32x128xf32>
    %47 = tpu.matmul %35, %46, %cst_18 {dimension_numbers = #tpu.dot_dimension_numbers<[1], [0], [0], [1], [0, 0, 1, 1], [], []>} : vector<32x32xbf16>, vector<32x128xbf16>, vector<32x128xf32> -> vector<32x128xf32>
    %48 = vector.broadcast %3 : vector<1x128xf32> to vector<32x128xf32>
    %49 = arith.addf %47, %48 : vector<32x128xf32>
    %c0_19 = arith.constant 0 : index
    %c0_20 = arith.constant 0 : index
    %50 = vector.load %arg2[%c0_19, %c0_20] : memref<8x32xbf16, #tpu.memory_space<vmem>>, vector<8x32xbf16>
    %51 = arith.truncf %49 : vector<32x128xf32> to vector<32x128xbf16>
    %cst_21 = arith.constant dense<0.000000e+00> : vector<8x128xf32>
    %52 = tpu.matmul %50, %51, %cst_21 {dimension_numbers = #tpu.dot_dimension_numbers<[1], [0], [0], [1], [0, 0, 1, 1], [], []>} : vector<8x32xbf16>, vector<32x128xbf16>, vector<8x128xf32> -> vector<8x128xf32>
    %cst_22 = arith.constant dense<0.000000e+00> : vector<128xf32>
    %53 = vector.multi_reduction <add>, %52, %cst_22 [0] : vector<8x128xf32> to vector<128xf32>
    %54 = vector.shape_cast %53 : vector<128xf32> to vector<1x128xf32>
    %cst_23 = arith.constant 2.500000e-01 : f32
    %55 = vector.broadcast %cst_23 : f32 to vector<1x128xf32>
    %56 = arith.mulf %54, %55 : vector<1x128xf32>
    %57 = tpu.iota {dimensions = array<i32: 0>} : vector<8x128xi32>
    %c4_i32 = arith.constant 4 : i32
    %58 = vector.broadcast %c4_i32 : i32 to vector<8x128xi32>
    %59 = arith.cmpi slt, %57, %58 : vector<8x128xi32>
    %60 = arith.extui %59 : vector<8x128xi1> to vector<8x128xi32>
    %61 = arith.sitofp %60 : vector<8x128xi32> to vector<8x128xf32>
    %62 = vector.broadcast %56 : vector<1x128xf32> to vector<8x128xf32>
    %63 = arith.subf %52, %62 : vector<8x128xf32>
    %64 = arith.mulf %63, %61 : vector<8x128xf32>
    %65 = arith.mulf %64, %64 : vector<8x128xf32>
    %cst_24 = arith.constant dense<0.000000e+00> : vector<128xf32>
    %66 = vector.multi_reduction <add>, %65, %cst_24 [0] : vector<8x128xf32> to vector<128xf32>
    %67 = vector.shape_cast %66 : vector<128xf32> to vector<1x128xf32>
    %cst_25 = arith.constant 2.500000e-01 : f32
    %68 = vector.broadcast %cst_25 : f32 to vector<1x128xf32>
    %69 = arith.mulf %67, %68 : vector<1x128xf32>
    %70 = vector.broadcast %56 : vector<1x128xf32> to vector<8x128xf32>
    %71 = arith.subf %52, %70 : vector<8x128xf32>
    %cst_26 = arith.constant 9.99999974E-6 : f32
    %72 = vector.broadcast %cst_26 : f32 to vector<1x128xf32>
    %73 = arith.addf %69, %72 : vector<1x128xf32>
    %74 = math.rsqrt %73 : vector<1x128xf32>
    %75 = vector.broadcast %74 : vector<1x128xf32> to vector<8x128xf32>
    %76 = arith.mulf %71, %75 : vector<8x128xf32>
    %77 = vector.broadcast %4 : vector<1x128xf32> to vector<8x128xf32>
    %78 = arith.mulf %76, %77 : vector<8x128xf32>
    %79 = vector.broadcast %5 : vector<1x128xf32> to vector<8x128xf32>
    %80 = arith.addf %78, %79 : vector<8x128xf32>
    %81 = arith.truncf %80 : vector<8x128xf32> to vector<8x128xbf16>
    %cst_27 = arith.constant dense<0.000000e+00> : vector<8x128xf32>
    %82 = tpu.matmul %81, %11, %cst_27 {dimension_numbers = #tpu.dot_dimension_numbers<[1], [0], [0], [1], [0, 0, 1, 1], [], []>} : vector<8x128xbf16>, vector<128x128xbf16>, vector<8x128xf32> -> vector<8x128xf32>
    %83 = vector.broadcast %6 : vector<1x128xf32> to vector<8x128xf32>
    %84 = arith.addf %82, %83 : vector<8x128xf32>
    %85 = arith.truncf %84 : vector<8x128xf32> to vector<8x128xbf16>
    %cst_28 = arith.constant dense<0.000000e+00> : vector<8x128xf32>
    %86 = tpu.matmul %85, %12, %cst_28 {dimension_numbers = #tpu.dot_dimension_numbers<[1], [0], [0], [1], [0, 0, 1, 1], [], []>} : vector<8x128xbf16>, vector<128x128xbf16>, vector<8x128xf32> -> vector<8x128xf32>
    %87 = vector.broadcast %7 : vector<1x128xf32> to vector<8x128xf32>
    %88 = arith.addf %86, %87 : vector<8x128xf32>
    %89 = arith.truncf %88 : vector<8x128xf32> to vector<8x128xbf16>
    %cst_29 = arith.constant dense<0.000000e+00> : vector<8x128xf32>
    %90 = tpu.matmul %89, %13, %cst_29 {dimension_numbers = #tpu.dot_dimension_numbers<[1], [0], [0], [1], [0, 0, 1, 1], [], []>} : vector<8x128xbf16>, vector<128x128xbf16>, vector<8x128xf32> -> vector<8x128xf32>
    %91 = vector.broadcast %8 : vector<1x128xf32> to vector<8x128xf32>
    %92 = arith.addf %90, %91 : vector<8x128xf32>
    %c0_30 = arith.constant 0 : index
    %c0_31 = arith.constant 0 : index
    %93 = vector.load %arg5[%c0_30, %c0_31] : memref<8x128xf32, #tpu.memory_space<vmem>>, vector<8x128xf32>
    tpu.vector_store %arg5[%c0_30, %c0_31], %92 {strides = array<i32>} : memref<8x128xf32, #tpu.memory_space<vmem>>, vector<8x128xf32>,
    return
  }
}

</mosaic_0001>

<llo_original>
// kernel: mul.6
$region0: #{mul.6}
  #allocation0 [shape = 's32[1]{0}', space=sflag, size = 0x4, scoped, tag = 'scoped memory for mul.6']
  %s0 = inlined_call_operand.vmem [shape: f32[64], index: 0, kind: input, shape index: {}]
  %s1 = inlined_call_operand.vmem [shape: f32[64], index: 1, kind: input, shape index: {}]
  %s2 = inlined_call_operand.vmem [shape: f32[64], index: 2, kind: output, shape index: {}]
  %v3 = vld [vmem:[%s0] sm:$0x1]
  %v4 = vld [vmem:[%s1] sm:$0x1]
  %5 = xla_tuple %v3, %v4
  %6 = xla_tuple %5
  %v7 = vmul.f32 %v3, %v4
  %8 = xla_tuple %v7
  %9 = vst [vmem:[%s2] sm:$0x1] %v7

// kernel: gcn_forward.1
$region0: #{gcn_forward.1}
  #allocation0 [shape = 'u32[]', space=smem, size = 0x4, offset = 0x4, fixed_abs, tag = 'smem constant byte address 0x4 - core index']
  #allocation1 [shape = 'u32[144,128]{1,0:T(1,128)}', space=vmem, size = 0x12000, scoped, tag = 'internal scratch']
  %s0 = inlined_call_operand.vmem [shape: f32[32,128], index: 0, kind: input, shape index: {}]
  %s1 = inlined_call_operand.vmem [shape: bf16[32,32], index: 1, kind: input, shape index: {}]
  %s2 = inlined_call_operand.vmem [shape: bf16[8,32], index: 2, kind: input, shape index: {}]
  %s3 = inlined_call_operand.vmem [shape: bf16[640,128], index: 3, kind: input, shape index: {}]
  %s4 = inlined_call_operand.vmem [shape: f32[8,128], index: 4, kind: input, shape index: {}]
  %s5 = inlined_call_operand.vmem [shape: f32[8,128], index: 5, kind: output, shape index: {}]
  %s6 = sld [smem:[#allocation0]]
  $region30: #{gcn_forward.1} parent=0
    _
  %s8 = ssub.s32 1, %s6
  %s9 = scalar_select 0, %s8, %s6
  // Predicated region
  $region2: #{gcn_forward.1} parent=0 // pred_check
    _
  $region3: #{gcn_forward.1} parent=0 // pred_check_branch
    %11 = sbr.rel (0) target = $region5
  $region4: #{gcn_forward.1} parent=0 // pred_region
    _
  $region5: #{gcn_forward.1} parent=0 // pred_fallthru
    _
  // Predicated region
  $region6: #{gcn_forward.1} parent=0 // pred_check
    _
  $region7: #{gcn_forward.1} parent=0 // pred_check_branch
    %13 = sbr.rel (0) target = $region9
  $region8: #{gcn_forward.1} parent=0 // pred_region
    _
  $region9: #{gcn_forward.1} parent=0 // pred_fallthru
    _
  // Predicated region
  $region10: #{gcn_forward.1} parent=0 // pred_check
    _
  $region11: #{gcn_forward.1} parent=0 // pred_check_branch
    %15 = sbr.rel (0) target = $region13
  $region12: #{gcn_forward.1} parent=0 // pred_region
    _
  $region13: #{gcn_forward.1} parent=0 // pred_fallthru
    _
  // Predicated region
  $region14: #{gcn_forward.1} parent=0 // pred_check
    _
  $region15: #{gcn_forward.1} parent=0 // pred_check_branch
    %17 = sbr.rel (0) target = $region17
  $region16: #{gcn_forward.1} parent=0 // pred_region
    _
  $region17: #{gcn_forward.1} parent=0 // pred_fallthru
    _
  // Predicated region
  $region18: #{gcn_forward.1} parent=0 // pred_check
    _
  $region19: #{gcn_forward.1} parent=0 // pred_check_branch
    %19 = sbr.rel (0) target = $region21
  $region20: #{gcn_forward.1} parent=0 // pred_region
    _
  $region21: #{gcn_forward.1} parent=0 // pred_fallthru
    _
  %v21 = vld [vmem:[%s4] sm:$0xff]
  %v22 = vld [vmem:[%s3] sm:$0xf]
  %v23 = vld [vmem:[%s3 + $0x4] sm:$0xf]
  %v24 = vld [vmem:[%s3 + $0x8] sm:$0xf]
  %v25 = vld [vmem:[%s3 + $0xc] sm:$0xf]
  %v26 = vld [vmem:[%s3 + $0x10] sm:$0xf]
  %v27 = vld [vmem:[%s3 + $0x14] sm:$0xf]
  %v28 = vld [vmem:[%s3 + $0x18] sm:$0xf]
  %v29 = vld [vmem:[%s3 + $0x1c] sm:$0xf]
  %v30 = vld [vmem:[%s3 + $0x20] sm:$0xf]
  %v31 = vld [vmem:[%s3 + $0x24] sm:$0xf]
  %v32 = vld [vmem:[%s3 + $0x28] sm:$0xf]
  %v33 = vld [vmem:[%s3 + $0x2c] sm:$0xf]
  %v34 = vld [vmem:[%s3 + $0x30] sm:$0xf]
  %v35 = vld [vmem:[%s3 + $0x34] sm:$0xf]
  %v36 = vld [vmem:[%s3 + $0x38] sm:$0xf]
  %v37 = vld [vmem:[%s3 + $0x3c] sm:$0xf]
  %v38 = vld [vmem:[%s3 + $0x40] sm:$0xf]
  %v39 = vld [vmem:[%s3 + $0x44] sm:$0xf]
  %v40 = vld [vmem:[%s3 + $0x48] sm:$0xf]
  %v41 = vld [vmem:[%s3 + $0x4c] sm:$0xf]
  %v42 = vld [vmem:[%s3 + $0x50] sm:$0xf]
  %v43 = vld [vmem:[%s3 + $0x54] sm:$0xf]
  %v44 = vld [vmem:[%s3 + $0x58] sm:$0xf]
  %v45 = vld [vmem:[%s3 + $0x5c] sm:$0xf]
  %v46 = vld [vmem:[%s3 + $0x60] sm:$0xf]
  %v47 = vld [vmem:[%s3 + $0x64] sm:$0xf]
  %v48 = vld [vmem:[%s3 + $0x68] sm:$0xf]
  %v49 = vld [vmem:[%s3 + $0x6c] sm:$0xf]
  %v50 = vld [vmem:[%s3 + $0x70] sm:$0xf]
  %v51 = vld [vmem:[%s3 + $0x74] sm:$0xf]
  %v52 = vld [vmem:[%s3 + $0x78] sm:$0xf]
  %v53 = vld [vmem:[%s3 + $0x7c] sm:$0xf]
  %v54 = vld [vmem:[%s3 + $0x80] sm:$0xf]
  %v55 = vld [vmem:[%s3 + $0x84] sm:$0xf]
  %v56 = vld [vmem:[%s3 + $0x88] sm:$0xf]
  %v57 = vld [vmem:[%s3 + $0x8c] sm:$0xf]
  %v58 = vld [vmem:[%s3 + $0x90] sm:$0xf]
  %v59 = vld [vmem:[%s3 + $0x94] sm:$0xf]
  %v60 = vld [vmem:[%s3 + $0x98] sm:$0xf]
  %v61 = vld [vmem:[%s3 + $0x9c] sm:$0xf]
  %v62 = vld [vmem:[%s3 + $0xa0] sm:$0xf]
  %v63 = vld [vmem:[%s3 + $0xa4] sm:$0xf]
  %v64 = vld [vmem:[%s3 + $0xa8] sm:$0xf]
  %v65 = vld [vmem:[%s3 + $0xac] sm:$0xf]
  %v66 = vld [vmem:[%s3 + $0xb0] sm:$0xf]
  %v67 = vld [vmem:[%s3 + $0xb4] sm:$0xf]
  %v68 = vld [vmem:[%s3 + $0xb8] sm:$0xf]
  %v69 = vld [vmem:[%s3 + $0xbc] sm:$0xf]
  %v70 = vld [vmem:[%s3 + $0xc0] sm:$0xf]
  %v71 = vld [vmem:[%s3 + $0xc4] sm:$0xf]
  %v72 = vld [vmem:[%s3 + $0xc8] sm:$0xf]
  %v73 = vld [vmem:[%s3 + $0xcc] sm:$0xf]
  %v74 = vld [vmem:[%s3 + $0xd0] sm:$0xf]
  %v75 = vld [vmem:[%s3 + $0xd4] sm:$0xf]
  %v76 = vld [vmem:[%s3 + $0xd8] sm:$0xf]
  %v77 = vld [vmem:[%s3 + $0xdc] sm:$0xf]
  %v78 = vld [vmem:[%s3 + $0xe0] sm:$0xf]
  %v79 = vld [vmem:[%s3 + $0xe4] sm:$0xf]
  %v80 = vld [vmem:[%s3 + $0xe8] sm:$0xf]
  %v81 = vld [vmem:[%s3 + $0xec] sm:$0xf]
  %v82 = vld [vmem:[%s3 + $0xf0] sm:$0xf]
  %v83 = vld [vmem:[%s3 + $0xf4] sm:$0xf]
  %v84 = vld [vmem:[%s3 + $0xf8] sm:$0xf]
  %v85 = vld [vmem:[%s3 + $0xfc] sm:$0xf]
  %v86 = vld [vmem:[%s3 + $0x100] sm:$0xf]
  %v87 = vld [vmem:[%s3 + $0x104] sm:$0xf]
  %v88 = vld [vmem:[%s3 + $0x108] sm:$0xf]
  %v89 = vld [vmem:[%s3 + $0x10c] sm:$0xf]
  %v90 = vld [vmem:[%s3 + $0x110] sm:$0xf]
  %v91 = vld [vmem:[%s3 + $0x114] sm:$0xf]
  %v92 = vld [vmem:[%s3 + $0x118] sm:$0xf]
  %v93 = vld [vmem:[%s3 + $0x11c] sm:$0xf]
  %v94 = vld [vmem:[%s3 + $0x120] sm:$0xf]
  %v95 = vld [vmem:[%s3 + $0x124] sm:$0xf]
  %v96 = vld [vmem:[%s3 + $0x128] sm:$0xf]
  %v97 = vld [vmem:[%s3 + $0x12c] sm:$0xf]
  %v98 = vld [vmem:[%s3 + $0x130] sm:$0xf]
  %v99 = vld [vmem:[%s3 + $0x134] sm:$0xf]
  %v100 = vld [vmem:[%s3 + $0x138] sm:$0xf]
  %v101 = vld [vmem:[%s3 + $0x13c] sm:$0xf]
  %v102 = vld [vmem:[%s0] sm:$0xff]
  %v103 = vld [vmem:[%s0 + $0x8] sm:$0xff]
  %v104 = vld [vmem:[%s0 + $0x10] sm:$0xff]
  %v105 = vld [vmem:[%s0 + $0x18] sm:$0xff]
  %v106 = vadd.f32 %v102, %v103
  %v107 = vadd.f32 %v106, %v104
  %v108 = vadd.f32 %v107, %v105
  %v109 = vrot.slane %v108, 4
  %v110 = vadd.f32 %v108, %v109
  %v111 = vrot.slane %v110, 2
  %v112 = vadd.f32 %v110, %v111
  %v113 = vrot.slane %v112, 1
  %v114 = vadd.f32 %v112, %v113
  %v115 = vrcp.pop 32.0
  %v116 = vmul.f32 %v114, %v115
  %v117 = vsub.f32 %v102, %v116
  %v118 = vsub.f32 %v103, %v116
  %v119 = vsub.f32 %v104, %v116
  %v120 = vsub.f32 %v105, %v116
  %v121 = vmul.f32 %v117, %v117
  %v122 = vmul.f32 %v118, %v118
  %v123 = vmul.f32 %v119, %v119
  %v124 = vmul.f32 %v120, %v120
  %v125 = vadd.f32 %v121, %v122
  %v126 = vadd.f32 %v125, %v123
  %v127 = vadd.f32 %v126, %v124
  %v128 = vrot.slane %v127, 4
  %v129 = vadd.f32 %v127, %v128
  %v130 = vrot.slane %v129, 2
  %v131 = vadd.f32 %v129, %v130
  %v132 = vrot.slane %v131, 1
  %v133 = vadd.f32 %v131, %v132
  %v134 = vmul.f32 %v133, %v115
  %v135 = vadd.f32 %v134, 1e-05
  %v136 = vrsqrt.pop %v135
  %v137 = vmul.f32 %v117, %v136
  %v138 = vmul.f32 %v118, %v136
  %v139 = vmul.f32 %v119, %v136
  %v140 = vmul.f32 %v120, %v136
  %v141 = vld [vmem:[%s1] sm:$0xf]
  %v142 = vld [vmem:[%s1 + $0x4] sm:$0xf]
  %v143 = vld [vmem:[%s1 + $0x8] sm:$0xf]
  %v144 = vld [vmem:[%s1 + $0xc] sm:$0xf]
  %v145 = vpack.c.bf16 %v138, %v137
  %v146 = vpack.c.bf16 %v140, %v139
  %v147 = vlaneseq
  %v148 = vshrl.u32 %v147, 7
  %v149 = vsub.s32 0, %v148
  %v150 = vrot.slane %v21, %v149
  %v167 = vunpack.c.l.b16 %v22
  %v168 = vunpack.c.l.b16 %v23
  %v169 = vunpack.c.l.b16 %v24
  %v170 = vunpack.c.l.b16 %v25
  %v171 = vunpack.c.l.b16 %v26
  %v172 = vunpack.c.l.b16 %v27
  %v173 = vunpack.c.l.b16 %v28
  %v174 = vunpack.c.l.b16 %v29
  %v175 = vunpack.c.l.b16 %v30
  %v176 = vunpack.c.l.b16 %v31
  %v177 = vunpack.c.l.b16 %v32
  %v178 = vunpack.c.l.b16 %v33
  %v179 = vunpack.c.l.b16 %v34
  %v180 = vunpack.c.l.b16 %v35
  %v181 = vunpack.c.l.b16 %v36
  %v182 = vunpack.c.l.b16 %v37
  %v183 = vpack.c.b16 %v168, %v167
  %v184 = vpack.c.b16 %v170, %v169
  %v185 = vpack.c.b16 %v172, %v171
  %v186 = vpack.c.b16 %v174, %v173
  %v187 = vpack.c.b16 %v176, %v175
  %v188 = vpack.c.b16 %v178, %v177
  %v189 = vpack.c.b16 %v180, %v179
  %v190 = vpack.c.b16 %v182, %v181
  %199 = vmatprep.subr.bf16.mxu0 0
  %200 = vmatpush1.bf16.msra.mxu0 %v183
  %201 = vmatprep.subr.bf16.mxu0 0
  %202 = vmatpush1.bf16.msra.mxu0 %v184
  %203 = vmatprep.subr.bf16.mxu0 0
  %204 = vmatpush1.bf16.msra.mxu0 %v185
  %205 = vmatprep.subr.bf16.mxu0 0
  %206 = vmatpush1.bf16.msra.mxu0 %v186
  %207 = vmatprep.subr.bf16.mxu0 0
  %208 = vmatpush1.bf16.msra.mxu0 %v187
  %209 = vmatprep.subr.bf16.mxu0 0
  %210 = vmatpush1.bf16.msra.mxu0 %v188
  %211 = vmatprep.subr.bf16.mxu0 0
  %212 = vmatpush1.bf16.msra.mxu0 %v189
  %213 = vmatprep.subr.bf16.mxu0 0
  %214 = vmatpush1.bf16.msra.mxu0 %v190
  %215 = vmatprep.subr.bf16.mxu0 0
  %216 = vmatpush1.bf16.msra.mxu0 0
  %217 = vmatprep.subr.bf16.mxu0 0
  %218 = vmatpush1.bf16.msra.mxu0 0
  %219 = vmatprep.subr.bf16.mxu0 0
  %220 = vmatpush1.bf16.msra.mxu0 0
  %221 = vmatprep.subr.bf16.mxu0 0
  %222 = vmatpush1.bf16.msra.mxu0 0
  %223 = vmatprep.subr.bf16.mxu0 0
  %224 = vmatpush1.bf16.msra.mxu0 0
  %225 = vmatprep.subr.bf16.mxu0 0
  %226 = vmatpush1.bf16.msra.mxu0 0
  %227 = vmatprep.subr.bf16.mxu0 0
  %228 = vmatpush1.bf16.msra.mxu0 0
  %229 = vmatprep.subr.bf16.mxu0 0
  %230 = vmatpush1.bf16.msra.mxu0 0
  %231 = vmatprep.mubr.bf16.mxu0 0
  %232 = vmatmul.mubr.bf16.gmra.mrb[0].mxu0 %v145
  %v233 = vpop.f32.mrb[0].mxu0
  %v234 = vadd.f32 %v150, %v233
  %v235 = vpop.f32.mrb[0].mxu0
  %v236 = vpop.f32.mrb[0].mxu0
  %v237 = vadd.f32 %v150, %v236
  %v238 = vpop.f32.mrb[0].mxu0
  %239 = vmatprep.mubr.bf16.mxu0 0
  %240 = vmatmul.mubr.bf16.gmra.mrb[0].mxu0 %v146
  %v241 = vpop.f32.mrb[0].mxu0
  %v242 = vadd.f32 %v150, %v241
  %v243 = vpop.f32.mrb[0].mxu0
  %v244 = vpop.f32.mrb[0].mxu0
  %v245 = vadd.f32 %v150, %v244
  %v246 = vpop.f32.mrb[0].mxu0
  %247 = vdwg.mxu0
  %v248 = vpack.c.bf16 %v237, %v234
  %v249 = vpack.c.bf16 %v245, %v242
  %v250 = vlaneseq
  %v251 = vshrl.u32 %v250, 7
  %v252 = vsub.s32 1, %v251
  %v253 = vrot.slane %v21, %v252
  %v258 = vunpack.c.l.b16 %v141
  %v259 = vunpack.c.l.b16 %v142
  %v260 = vunpack.c.l.b16 %v143
  %v261 = vunpack.c.l.b16 %v144
  %v262 = vpack.c.b16 %v259, %v258
  %v263 = vpack.c.b16 %v261, %v260
  %vm264 = vcmask 261120
  %v266 = vsel %vm264, %v262, 0
  %v269 = vsel %vm264, %v263, 0
  %271 = vmatprep.subr.bf16.mxu0 0
  %272 = vmatpush1.bf16.msra.mxu0 %v248
  %273 = vmatprep.subr.bf16.mxu0 0
  %274 = vmatpush1.bf16.msra.mxu0 %v249
  %275 = vmatprep.subr.bf16.mxu0 0
  %276 = vmatpush1.bf16.msra.mxu0 0
  %277 = vmatprep.subr.bf16.mxu0 0
  %278 = vmatpush1.bf16.msra.mxu0 0
  %279 = vmatprep.subr.bf16.mxu0 0
  %280 = vmatpush1.bf16.msra.mxu0 0
  %281 = vmatprep.subr.bf16.mxu0 0
  %282 = vmatpush1.bf16.msra.mxu0 0
  %283 = vmatprep.subr.bf16.mxu0 0
  %284 = vmatpush1.bf16.msra.mxu0 0
  %285 = vmatprep.subr.bf16.mxu0 0
  %286 = vmatpush1.bf16.msra.mxu0 0
  %287 = vmatprep.subr.bf16.mxu0 0
  %288 = vmatpush1.bf16.msra.mxu0 0
  %289 = vmatprep.subr.bf16.mxu0 0
  %290 = vmatpush1.bf16.msra.mxu0 0
  %291 = vmatprep.subr.bf16.mxu0 0
  %292 = vmatpush1.bf16.msra.mxu0 0
  %293 = vmatprep.subr.bf16.mxu0 0
  %294 = vmatpush1.bf16.msra.mxu0 0
  %295 = vmatprep.subr.bf16.mxu0 0
  %296 = vmatpush1.bf16.msra.mxu0 0
  %297 = vmatprep.subr.bf16.mxu0 0
  %298 = vmatpush1.bf16.msra.mxu0 0
  %299 = vmatprep.subr.bf16.mxu0 0
  %300 = vmatpush1.bf16.msra.mxu0 0
  %301 = vmatprep.subr.bf16.mxu0 0
  %302 = vmatpush1.bf16.msra.mxu0 0
  %303 = vmatprep.mubr.bf16.mxu0 0
  %304 = vmatmul.mubr.bf16.gmra.mrb[0].mxu0 %v266
  %v305 = vpop.f32.mrb[0].mxu0
  %v306 = vadd.f32 %v253, %v305
  %v307 = vpop.f32.mrb[0].mxu0
  %v308 = vpop.f32.mrb[0].mxu0
  %v309 = vadd.f32 %v253, %v308
  %v310 = vpop.f32.mrb[0].mxu0
  %311 = vmatprep.mubr.bf16.mxu0 0
  %312 = vmatmul.mubr.bf16.gmra.mrb[0].mxu0 %v269
  %v313 = vpop.f32.mrb[0].mxu0
  %v314 = vadd.f32 %v253, %v313
  %v315 = vpop.f32.mrb[0].mxu0
  %v316 = vpop.f32.mrb[0].mxu0
  %v317 = vadd.f32 %v253, %v316
  %v318 = vpop.f32.mrb[0].mxu0
  %319 = vdwg.mxu0
  %v320 = vpack.c.bf16 %v309, %v306
  %v321 = vpack.c.bf16 %v317, %v314
  %v338 = vunpack.c.l.b16 %v38
  %v339 = vunpack.c.l.b16 %v39
  %v340 = vunpack.c.l.b16 %v40
  %v341 = vunpack.c.l.b16 %v41
  %v342 = vunpack.c.l.b16 %v42
  %v343 = vunpack.c.l.b16 %v43
  %v344 = vunpack.c.l.b16 %v44
  %v345 = vunpack.c.l.b16 %v45
  %v346 = vunpack.c.l.b16 %v46
  %v347 = vunpack.c.l.b16 %v47
  %v348 = vunpack.c.l.b16 %v48
  %v349 = vunpack.c.l.b16 %v49
  %v350 = vunpack.c.l.b16 %v50
  %v351 = vunpack.c.l.b16 %v51
  %v352 = vunpack.c.l.b16 %v52
  %v353 = vunpack.c.l.b16 %v53
  %v354 = vpack.c.b16 %v339, %v338
  %v355 = vpack.c.b16 %v341, %v340
  %v356 = vpack.c.b16 %v343, %v342
  %v357 = vpack.c.b16 %v345, %v344
  %v358 = vpack.c.b16 %v347, %v346
  %v359 = vpack.c.b16 %v349, %v348
  %v360 = vpack.c.b16 %v351, %v350
  %v361 = vpack.c.b16 %v353, %v352
  %370 = vmatprep.subr.bf16.mxu0 0
  %371 = vmatpush1.bf16.msra.mxu0 %v354
  %372 = vmatprep.subr.bf16.mxu0 0
  %373 = vmatpush1.bf16.msra.mxu0 %v355
  %374 = vmatprep.subr.bf16.mxu0 0
  %375 = vmatpush1.bf16.msra.mxu0 %v356
  %376 = vmatprep.subr.bf16.mxu0 0
  %377 = vmatpush1.bf16.msra.mxu0 %v357
  %378 = vmatprep.subr.bf16.mxu0 0
  %379 = vmatpush1.bf16.msra.mxu0 %v358
  %380 = vmatprep.subr.bf16.mxu0 0
  %381 = vmatpush1.bf16.msra.mxu0 %v359
  %382 = vmatprep.subr.bf16.mxu0 0
  %383 = vmatpush1.bf16.msra.mxu0 %v360
  %384 = vmatprep.subr.bf16.mxu0 0
  %385 = vmatpush1.bf16.msra.mxu0 %v361
  %386 = vmatprep.subr.bf16.mxu0 0
  %387 = vmatpush1.bf16.msra.mxu0 0
  %388 = vmatprep.subr.bf16.mxu0 0
  %389 = vmatpush1.bf16.msra.mxu0 0
  %390 = vmatprep.subr.bf16.mxu0 0
  %391 = vmatpush1.bf16.msra.mxu0 0
  %392 = vmatprep.subr.bf16.mxu0 0
  %393 = vmatpush1.bf16.msra.mxu0 0
  %394 = vmatprep.subr.bf16.mxu0 0
  %395 = vmatpush1.bf16.msra.mxu0 0
  %396 = vmatprep.subr.bf16.mxu0 0
  %397 = vmatpush1.bf16.msra.mxu0 0
  %398 = vmatprep.subr.bf16.mxu0 0
  %399 = vmatpush1.bf16.msra.mxu0 0
  %400 = vmatprep.subr.bf16.mxu0 0
  %401 = vmatpush1.bf16.msra.mxu0 0
  %402 = vmatprep.mubr.bf16.mxu0 0
  %403 = vmatmul.mubr.bf16.gmra.mrb[0].mxu0 %v320
  %v404 = vpop.f32.mrb[0].mxu0
  %v405 = vadd.f32 0.0, %v404
  %v406 = vpop.f32.mrb[0].mxu0
  %v407 = vpop.f32.mrb[0].mxu0
  %v408 = vadd.f32 0.0, %v407
  %v409 = vpop.f32.mrb[0].mxu0
  %410 = vmatprep.mubr.bf16.mxu0 0
  %411 = vmatmul.mubr.bf16.gmra.mrb[0].mxu0 %v321
  %v412 = vpop.f32.mrb[0].mxu0
  %v413 = vadd.f32 0.0, %v412
  %v414 = vpop.f32.mrb[0].mxu0
  %v415 = vpop.f32.mrb[0].mxu0
  %v416 = vadd.f32 0.0, %v415
  %v417 = vpop.f32.mrb[0].mxu0
  %418 = vdwg.mxu0
  %v419 = vpack.c.bf16 %v408, %v405
  %v420 = vpack.c.bf16 %v416, %v413
  %v421 = vlaneseq
  %v422 = vshrl.u32 %v421, 7
  %v423 = vsub.s32 2, %v422
  %v424 = vrot.slane %v21, %v423
  %425 = vmatprep.subr.bf16.mxu0 0
  %426 = vmatpush1.bf16.msra.mxu0 %v419
  %427 = vmatprep.subr.bf16.mxu0 0
  %428 = vmatpush1.bf16.msra.mxu0 %v420
  %429 = vmatprep.subr.bf16.mxu0 0
  %430 = vmatpush1.bf16.msra.mxu0 0
  %431 = vmatprep.subr.bf16.mxu0 0
  %432 = vmatpush1.bf16.msra.mxu0 0
  %433 = vmatprep.subr.bf16.mxu0 0
  %434 = vmatpush1.bf16.msra.mxu0 0
  %435 = vmatprep.subr.bf16.mxu0 0
  %436 = vmatpush1.bf16.msra.mxu0 0
  %437 = vmatprep.subr.bf16.mxu0 0
  %438 = vmatpush1.bf16.msra.mxu0 0
  %439 = vmatprep.subr.bf16.mxu0 0
  %440 = vmatpush1.bf16.msra.mxu0 0
  %441 = vmatprep.subr.bf16.mxu0 0
  %442 = vmatpush1.bf16.msra.mxu0 0
  %443 = vmatprep.subr.bf16.mxu0 0
  %444 = vmatpush1.bf16.msra.mxu0 0
  %445 = vmatprep.subr.bf16.mxu0 0
  %446 = vmatpush1.bf16.msra.mxu0 0
  %447 = vmatprep.subr.bf16.mxu0 0
  %448 = vmatpush1.bf16.msra.mxu0 0
  %449 = vmatprep.subr.bf16.mxu0 0
  %450 = vmatpush1.bf16.msra.mxu0 0
  %451 = vmatprep.subr.bf16.mxu0 0
  %452 = vmatpush1.bf16.msra.mxu0 0
  %453 = vmatprep.subr.bf16.mxu0 0
  %454 = vmatpush1.bf16.msra.mxu0 0
  %455 = vmatprep.subr.bf16.mxu0 0
  %456 = vmatpush1.bf16.msra.mxu0 0
  %457 = vmatprep.mubr.bf16.mxu0 0
  %458 = vmatmul.mubr.bf16.gmra.mrb[0].mxu0 %v266
  %v459 = vpop.f32.mrb[0].mxu0
  %v460 = vadd.f32 %v424, %v459
  %v461 = vpop.f32.mrb[0].mxu0
  %v462 = vpop.f32.mrb[0].mxu0
  %v463 = vadd.f32 %v424, %v462
  %v464 = vpop.f32.mrb[0].mxu0
  %465 = vmatprep.mubr.bf16.mxu0 0
  %466 = vmatmul.mubr.bf16.gmra.mrb[0].mxu0 %v269
  %v467 = vpop.f32.mrb[0].mxu0
  %v468 = vadd.f32 %v424, %v467
  %v469 = vpop.f32.mrb[0].mxu0
  %v470 = vpop.f32.mrb[0].mxu0
  %v471 = vadd.f32 %v424, %v470
  %v472 = vpop.f32.mrb[0].mxu0
  %473 = vdwg.mxu0
  %v474 = vld [vmem:[%s2] sm:$0xf]
  %v475 = vpack.c.bf16 %v463, %v460
  %v476 = vpack.c.bf16 %v471, %v468
  %v478 = vsel %vm264, %v474, 0
  %480 = vmatprep.subr.bf16.mxu0 0
  %481 = vmatpush1.bf16.msra.mxu0 %v475
  %482 = vmatprep.subr.bf16.mxu0 0
  %483 = vmatpush1.bf16.msra.mxu0 %v476
  %484 = vmatprep.subr.bf16.mxu0 0
  %485 = vmatpush1.bf16.msra.mxu0 0
  %486 = vmatprep.subr.bf16.mxu0 0
  %487 = vmatpush1.bf16.msra.mxu0 0
  %488 = vmatprep.subr.bf16.mxu0 0
  %489 = vmatpush1.bf16.msra.mxu0 0
  %490 = vmatprep.subr.bf16.mxu0 0
  %491 = vmatpush1.bf16.msra.mxu0 0
  %492 = vmatprep.subr.bf16.mxu0 0
  %493 = vmatpush1.bf16.msra.mxu0 0
  %494 = vmatprep.subr.bf16.mxu0 0
  %495 = vmatpush1.bf16.msra.mxu0 0
  %496 = vmatprep.subr.bf16.mxu0 0
  %497 = vmatpush1.bf16.msra.mxu0 0
  %498 = vmatprep.subr.bf16.mxu0 0
  %499 = vmatpush1.bf16.msra.mxu0 0
  %500 = vmatprep.subr.bf16.mxu0 0
  %501 = vmatpush1.bf16.msra.mxu0 0
  %502 = vmatprep.subr.bf16.mxu0 0
  %503 = vmatpush1.bf16.msra.mxu0 0
  %504 = vmatprep.subr.bf16.mxu0 0
  %505 = vmatpush1.bf16.msra.mxu0 0
  %506 = vmatprep.subr.bf16.mxu0 0
  %507 = vmatpush1.bf16.msra.mxu0 0
  %508 = vmatprep.subr.bf16.mxu0 0
  %509 = vmatpush1.bf16.msra.mxu0 0
  %510 = vmatprep.subr.bf16.mxu0 0
  %511 = vmatpush1.bf16.msra.mxu0 0
  %512 = vmatprep.mubr.bf16.mxu0 0
  %513 = vmatmul.mubr.bf16.gmra.mrb[0].mxu0 %v478
  %v514 = vpop.f32.mrb[0].mxu0
  %v515 = vadd.f32 0.0, %v514
  %v516 = vpop.f32.mrb[0].mxu0
  %v517 = vpop.f32.mrb[0].mxu0
  %v518 = vpop.f32.mrb[0].mxu0
  %519 = vdwg.mxu0
  %v520 = vrot.slane %v515, 4
  %v521 = vadd.f32 %v515, %v520
  %v522 = vrot.slane %v521, 2
  %v523 = vadd.f32 %v521, %v522
  %v524 = vrot.slane %v523, 1
  %v525 = vadd.f32 %v523, %v524
  %v526 = vmul.f32 %v525, 0.25
  %v527 = vlaneseq
  %v528 = vshrl.u32 %v527, 7
  %vm529 = vcmp.lt.s32.totalorder %v528, 4
  %v530 = vsel %vm529, 1, 0
  %v531 = vcvt.s32.f32 %v530
  %v532 = vsub.f32 %v515, %v526
  %v533 = vmul.f32 %v532, %v531
  %v534 = vmul.f32 %v533, %v533
  %v535 = vrot.slane %v534, 4
  %v536 = vadd.f32 %v534, %v535
  %v537 = vrot.slane %v536, 2
  %v538 = vadd.f32 %v536, %v537
  %v539 = vrot.slane %v538, 1
  %v540 = vadd.f32 %v538, %v539
  %v541 = vmul.f32 %v540, 0.25
  %v542 = vadd.f32 %v541, 1e-05
  %v543 = vrsqrt.pop %v542
  %v544 = vmul.f32 %v532, %v543
  %v545 = vlaneseq
  %v546 = vshrl.u32 %v545, 7
  %v547 = vsub.s32 3, %v546
  %v548 = vrot.slane %v21, %v547
  %v549 = vmul.f32 %v544, %v548
  %v550 = vlaneseq
  %v551 = vshrl.u32 %v550, 7
  %v552 = vsub.s32 4, %v551
  %v553 = vrot.slane %v21, %v552
  %v554 = vadd.f32 %v549, %v553
  %v555 = vpack.c.bf16 %v554, %v554
  %v556 = vlaneseq
  %v557 = vshrl.u32 %v556, 7
  %v558 = vsub.s32 5, %v557
  %v559 = vrot.slane %v21, %v558
  %v576 = vunpack.c.l.b16 %v54
  %v577 = vunpack.c.l.b16 %v55
  %v578 = vunpack.c.l.b16 %v56
  %v579 = vunpack.c.l.b16 %v57
  %v580 = vunpack.c.l.b16 %v58
  %v581 = vunpack.c.l.b16 %v59
  %v582 = vunpack.c.l.b16 %v60
  %v583 = vunpack.c.l.b16 %v61
  %v584 = vunpack.c.l.b16 %v62
  %v585 = vunpack.c.l.b16 %v63
  %v586 = vunpack.c.l.b16 %v64
  %v587 = vunpack.c.l.b16 %v65
  %v588 = vunpack.c.l.b16 %v66
  %v589 = vunpack.c.l.b16 %v67
  %v590 = vunpack.c.l.b16 %v68
  %v591 = vunpack.c.l.b16 %v69
  %v592 = vpack.c.b16 %v577, %v576
  %v593 = vpack.c.b16 %v579, %v578
  %v594 = vpack.c.b16 %v581, %v580
  %v595 = vpack.c.b16 %v583, %v582
  %v596 = vpack.c.b16 %v585, %v584
  %v597 = vpack.c.b16 %v587, %v586
  %v598 = vpack.c.b16 %v589, %v588
  %v599 = vpack.c.b16 %v591, %v590
  %608 = vmatprep.subr.bf16.mxu0 0
  %609 = vmatpush1.bf16.msra.mxu0 %v592
  %610 = vmatprep.subr.bf16.mxu0 0
  %611 = vmatpush1.bf16.msra.mxu0 %v593
  %612 = vmatprep.subr.bf16.mxu0 0
  %613 = vmatpush1.bf16.msra.mxu0 %v594
  %614 = vmatprep.subr.bf16.mxu0 0
  %615 = vmatpush1.bf16.msra.mxu0 %v595
  %616 = vmatprep.subr.bf16.mxu0 0
  %617 = vmatpush1.bf16.msra.mxu0 %v596
  %618 = vmatprep.subr.bf16.mxu0 0
  %619 = vmatpush1.bf16.msra.mxu0 %v597
  %620 = vmatprep.subr.bf16.mxu0 0
  %621 = vmatpush1.bf16.msra.mxu0 %v598
  %622 = vmatprep.subr.bf16.mxu0 0
  %623 = vmatpush1.bf16.msra.mxu0 %v599
  %624 = vmatprep.subr.bf16.mxu0 0
  %625 = vmatpush1.bf16.msra.mxu0 0
  %626 = vmatprep.subr.bf16.mxu0 0
  %627 = vmatpush1.bf16.msra.mxu0 0
  %628 = vmatprep.subr.bf16.mxu0 0
  %629 = vmatpush1.bf16.msra.mxu0 0
  %630 = vmatprep.subr.bf16.mxu0 0
  %631 = vmatpush1.bf16.msra.mxu0 0
  %632 = vmatprep.subr.bf16.mxu0 0
  %633 = vmatpush1.bf16.msra.mxu0 0
  %634 = vmatprep.subr.bf16.mxu0 0
  %635 = vmatpush1.bf16.msra.mxu0 0
  %636 = vmatprep.subr.bf16.mxu0 0
  %637 = vmatpush1.bf16.msra.mxu0 0
  %638 = vmatprep.subr.bf16.mxu0 0
  %639 = vmatpush1.bf16.msra.mxu0 0
  %640 = vmatprep.mubr.bf16.mxu0 0
  %641 = vmatmul.mubr.bf16.gmra.mrb[0].mxu0 %v555
  %v642 = vpop.f32.mrb[0].mxu0
  %v643 = vadd.f32 %v559, %v642
  %v644 = vpop.f32.mrb[0].mxu0
  %v645 = vpop.f32.mrb[0].mxu0
  %v646 = vpop.f32.mrb[0].mxu0
  %647 = vdwg.mxu0
  %v648 = vpack.c.bf16 %v643, %v643
  %v649 = vlaneseq
  %v650 = vshrl.u32 %v649, 7
  %v651 = vsub.s32 6, %v650
  %v652 = vrot.slane %v21, %v651
  %v669 = vunpack.c.l.b16 %v70
  %v670 = vunpack.c.l.b16 %v71
  %v671 = vunpack.c.l.b16 %v72
  %v672 = vunpack.c.l.b16 %v73
  %v673 = vunpack.c.l.b16 %v74
  %v674 = vunpack.c.l.b16 %v75
  %v675 = vunpack.c.l.b16 %v76
  %v676 = vunpack.c.l.b16 %v77
  %v677 = vunpack.c.l.b16 %v78
  %v678 = vunpack.c.l.b16 %v79
  %v679 = vunpack.c.l.b16 %v80
  %v680 = vunpack.c.l.b16 %v81
  %v681 = vunpack.c.l.b16 %v82
  %v682 = vunpack.c.l.b16 %v83
  %v683 = vunpack.c.l.b16 %v84
  %v684 = vunpack.c.l.b16 %v85
  %v685 = vpack.c.b16 %v670, %v669
  %v686 = vpack.c.b16 %v672, %v671
  %v687 = vpack.c.b16 %v674, %v673
  %v688 = vpack.c.b16 %v676, %v675
  %v689 = vpack.c.b16 %v678, %v677
  %v690 = vpack.c.b16 %v680, %v679
  %v691 = vpack.c.b16 %v682, %v681
  %v692 = vpack.c.b16 %v684, %v683
  %701 = vmatprep.subr.bf16.mxu0 0
  %702 = vmatpush1.bf16.msra.mxu0 %v685
  %703 = vmatprep.subr.bf16.mxu0 0
  %704 = vmatpush1.bf16.msra.mxu0 %v686
  %705 = vmatprep.subr.bf16.mxu0 0
  %706 = vmatpush1.bf16.msra.mxu0 %v687
  %707 = vmatprep.subr.bf16.mxu0 0
  %708 = vmatpush1.bf16.msra.mxu0 %v688
  %709 = vmatprep.subr.bf16.mxu0 0
  %710 = vmatpush1.bf16.msra.mxu0 %v689
  %711 = vmatprep.subr.bf16.mxu0 0
  %712 = vmatpush1.bf16.msra.mxu0 %v690
  %713 = vmatprep.subr.bf16.mxu0 0
  %714 = vmatpush1.bf16.msra.mxu0 %v691
  %715 = vmatprep.subr.bf16.mxu0 0
  %716 = vmatpush1.bf16.msra.mxu0 %v692
  %717 = vmatprep.subr.bf16.mxu0 0
  %718 = vmatpush1.bf16.msra.mxu0 0
  %719 = vmatprep.subr.bf16.mxu0 0
  %720 = vmatpush1.bf16.msra.mxu0 0
  %721 = vmatprep.subr.bf16.mxu0 0
  %722 = vmatpush1.bf16.msra.mxu0 0
  %723 = vmatprep.subr.bf16.mxu0 0
  %724 = vmatpush1.bf16.msra.mxu0 0
  %725 = vmatprep.subr.bf16.mxu0 0
  %726 = vmatpush1.bf16.msra.mxu0 0
  %727 = vmatprep.subr.bf16.mxu0 0
  %728 = vmatpush1.bf16.msra.mxu0 0
  %729 = vmatprep.subr.bf16.mxu0 0
  %730 = vmatpush1.bf16.msra.mxu0 0
  %731 = vmatprep.subr.bf16.mxu0 0
  %732 = vmatpush1.bf16.msra.mxu0 0
  %733 = vmatprep.mubr.bf16.mxu0 0
  %734 = vmatmul.mubr.bf16.gmra.mrb[0].mxu0 %v648
  %v735 = vpop.f32.mrb[0].mxu0
  %v736 = vadd.f32 %v652, %v735
  %v737 = vpop.f32.mrb[0].mxu0
  %v738 = vpop.f32.mrb[0].mxu0
  %v739 = vpop.f32.mrb[0].mxu0
  %740 = vdwg.mxu0
  %v741 = vpack.c.bf16 %v736, %v736
  %v742 = vlaneseq
  %v743 = vshrl.u32 %v742, 7
  %v744 = vsub.s32 7, %v743
  %v745 = vrot.slane %v21, %v744
  %v762 = vunpack.c.l.b16 %v86
  %v763 = vunpack.c.l.b16 %v87
  %v764 = vunpack.c.l.b16 %v88
  %v765 = vunpack.c.l.b16 %v89
  %v766 = vunpack.c.l.b16 %v90
  %v767 = vunpack.c.l.b16 %v91
  %v768 = vunpack.c.l.b16 %v92
  %v769 = vunpack.c.l.b16 %v93
  %v770 = vunpack.c.l.b16 %v94
  %v771 = vunpack.c.l.b16 %v95
  %v772 = vunpack.c.l.b16 %v96
  %v773 = vunpack.c.l.b16 %v97
  %v774 = vunpack.c.l.b16 %v98
  %v775 = vunpack.c.l.b16 %v99
  %v776 = vunpack.c.l.b16 %v100
  %v777 = vunpack.c.l.b16 %v101
  %v778 = vpack.c.b16 %v763, %v762
  %v779 = vpack.c.b16 %v765, %v764
  %v780 = vpack.c.b16 %v767, %v766
  %v781 = vpack.c.b16 %v769, %v768
  %v782 = vpack.c.b16 %v771, %v770
  %v783 = vpack.c.b16 %v773, %v772
  %v784 = vpack.c.b16 %v775, %v774
  %v785 = vpack.c.b16 %v777, %v776
  %794 = vmatprep.subr.bf16.mxu0 0
  %795 = vmatpush1.bf16.msra.mxu0 %v778
  %796 = vmatprep.subr.bf16.mxu0 0
  %797 = vmatpush1.bf16.msra.mxu0 %v779
  %798 = vmatprep.subr.bf16.mxu0 0
  %799 = vmatpush1.bf16.msra.mxu0 %v780
  %800 = vmatprep.subr.bf16.mxu0 0
  %801 = vmatpush1.bf16.msra.mxu0 %v781
  %802 = vmatprep.subr.bf16.mxu0 0
  %803 = vmatpush1.bf16.msra.mxu0 %v782
  %804 = vmatprep.subr.bf16.mxu0 0
  %805 = vmatpush1.bf16.msra.mxu0 %v783
  %806 = vmatprep.subr.bf16.mxu0 0
  %807 = vmatpush1.bf16.msra.mxu0 %v784
  %808 = vmatprep.subr.bf16.mxu0 0
  %809 = vmatpush1.bf16.msra.mxu0 %v785
  %810 = vmatprep.subr.bf16.mxu0 0
  %811 = vmatpush1.bf16.msra.mxu0 0
  %812 = vmatprep.subr.bf16.mxu0 0
  %813 = vmatpush1.bf16.msra.mxu0 0
  %814 = vmatprep.subr.bf16.mxu0 0
  %815 = vmatpush1.bf16.msra.mxu0 0
  %816 = vmatprep.subr.bf16.mxu0 0
  %817 = vmatpush1.bf16.msra.mxu0 0
  %818 = vmatprep.subr.bf16.mxu0 0
  %819 = vmatpush1.bf16.msra.mxu0 0
  %820 = vmatprep.subr.bf16.mxu0 0
  %821 = vmatpush1.bf16.msra.mxu0 0
  %822 = vmatprep.subr.bf16.mxu0 0
  %823 = vmatpush1.bf16.msra.mxu0 0
  %824 = vmatprep.subr.bf16.mxu0 0
  %825 = vmatpush1.bf16.msra.mxu0 0
  %826 = vmatprep.mubr.bf16.mxu0 0
  %827 = vmatmul.mubr.bf16.gmra.mrb[0].mxu0 %v741
  %v828 = vpop.f32.mrb[0].mxu0
  %v829 = vadd.f32 %v745, %v828
  %v830 = vpop.f32.mrb[0].mxu0
  %v831 = vpop.f32.mrb[0].mxu0
  %v832 = vpop.f32.mrb[0].mxu0
  %833 = vdwg.mxu0
  %834 = vst [vmem:[%s5] sm:$0xff] %v829
  // Predicated region
  $region22: #{gcn_forward.1} parent=0 // pred_check
    _
  $region23: #{gcn_forward.1} parent=0 // pred_check_branch
    %836 = sbr.rel (0) target = $region25
  $region24: #{gcn_forward.1} parent=0 // pred_region
    _
  $region25: #{gcn_forward.1} parent=0 // pred_fallthru
    _
  // Predicated region
  $region26: #{gcn_forward.1} parent=0 // pred_check
    _
  $region27: #{gcn_forward.1} parent=0 // pred_check_branch
    %838 = sbr.rel (0) target = $region29
  $region28: #{gcn_forward.1} parent=0 // pred_region
    _
  $region29: #{gcn_forward.1} parent=0 // pred_fallthru
    _

</llo_original>
